<compile_context>
chip_gen: v7x
topology: tpu7x:2x2x1
jax: 0.10.0
libtpu: 0.0.40
codegen_flags: <defaults>
</compile_context>

<pallas_src>
import functools
import numpy as np
import jax
import jax.numpy as jnp
from jax import lax
from jax.experimental import pallas as pl
from jax.experimental.pallas import tpu as pltpu

_LANE = 128
_SUBLANE = 8


# ---------------------------------------------------------------------------
# Quadrature weights (plain numpy/JAX "parameter" setup, deterministic)
# ---------------------------------------------------------------------------
def _clenshaw_curtis_weights(n: int) -> np.ndarray:
    """Clenshaw-Curtis weights for nodes x_j = cos(pi*j/(n-1)), integrating over [-1, 1]."""
    assert n > 1
    N = n - 1
    j = np.arange(n)
    theta = np.pi * j / N
    K = N // 2
    k = np.arange(1, K + 1)
    b = np.where(k == N / 2.0, 1.0, 2.0)
    terms = (b / (4.0 * k**2 - 1.0))[None, :] * np.cos(2.0 * np.outer(theta, k))
    w = (2.0 / N) * (1.0 - terms.sum(axis=1))
    w[0] *= 0.5
    w[-1] *= 0.5
    return w


def get_quadrature_weights(nlat: int, nlon: int, grid: str = "equiangular",
                           normalized: bool = True) -> jnp.ndarray:
    if grid != "equiangular":
        raise NotImplementedError("only 'equiangular' grid implemented in this synthetic script")
    w = _clenshaw_curtis_weights(nlat)            # latitude quadrature weights, shape (nlat,)
    q = w.reshape(-1, 1) * 2.0 * np.pi / nlon     # (nlat, 1)
    if normalized:
        q = q / q.sum() / float(nlon)
    return jnp.asarray(q, dtype=jnp.float32)      # (nlat, 1) float32 (matches torch buffer)


# ---------------------------------------------------------------------------
# Pallas kernel: log-softmax + CE + focal term + spherical integration, fused
# ---------------------------------------------------------------------------
def _focal_loss_kernel(prd_ref, tar_ref, qw_ref, out_ref, *,
                       alpha: float, gamma: float, ignore_index: int,
                       r_blk: int, qw_resident: bool):
    x = prd_ref[...].astype(jnp.float32)              # (C, R_blk, 128)
    tgt = tar_ref[...].astype(jnp.int32)               # (R_blk, 128)

    # log-softmax pieces over the channel (leading) axis: elementwise across C vreg slabs
    m = jnp.max(x, axis=0)                              # (R_blk, 128)
    z = x - m[None, :, :]                               # (C, R_blk, 128)
    lse = jnp.log(jnp.sum(jnp.exp(z), axis=0))          # (R_blk, 128)

    # pick z at the target class without materializing logp; ignored pixels never match
    class_ids = lax.broadcasted_iota(jnp.int32, x.shape, 0)
    onehot = class_ids == tgt[None, :, :]
    ztgt = jnp.sum(jnp.where(onehot, z, 0.0), axis=0)   # (R_blk, 128)

    valid = tgt != ignore_index
    ce = jnp.where(valid, lse - ztgt, 0.0)              # (R_blk, 128); 0 for ignored / padded

    # focal modulation
    p = 1.0 - jnp.exp(-ce)
    if float(gamma) == 2.0:
        mod = p * p
    else:
        mod = jnp.power(jnp.maximum(p, 0.0), gamma)     # clamp: roundoff can push p < 0
    fl = alpha * mod * ce

    # weighted spherical integration over this chunk
    if qw_resident:
        row0 = pl.multiple_of(pl.program_id(1) * r_blk, r_blk)
        qw = qw_ref[pl.ds(row0, r_blk), :]               # slice the resident (R_pad, 128) buffer
    else:
        qw = qw_ref[...]                                 # (R_blk, 128) tile
    out_ref[...] = jnp.sum(fl * qw, keepdims=True)       # (1, 1) per-(batch, chunk) partial


def focal_loss_s2(prd: jnp.ndarray, tar: jnp.ndarray, quad_weights: jnp.ndarray, *,
                  alpha: float = 0.25, gamma: float = 2.0,
                  ignore_index: int = -100) -> jnp.ndarray:
    """prd: (B, C, nlat, nlon); tar: (B, nlat, nlon) int class indices; quad_weights: (nlat, 1)."""
    B, C, nlat, nlon = prd.shape
    S = nlat * nlon
    prd_isize = jnp.dtype(prd.dtype).itemsize
    tar_i = tar if jnp.issubdtype(tar.dtype, jnp.signedinteger) else tar.astype(jnp.int32)
    tar_isize = jnp.dtype(tar_i.dtype).itemsize

    # ---- tiling: (rows of 128 lanes), rows per chunk multiple of 8, ~4 MiB logits tile ----
    R = pl.cdiv(S, _LANE)                                 # 128-lane rows needed
    row_bytes = C * _LANE * prd_isize
    tile_budget = 4 * 1024 * 1024
    r_blk_max = max(_SUBLANE, (tile_budget // row_bytes) // _SUBLANE * _SUBLANE)
    r_blk = min(pl.cdiv(R, _SUBLANE) * _SUBLANE, r_blk_max)
    ns = pl.cdiv(R, r_blk)
    r_pad = ns * r_blk
    s_pad_total = r_pad * _LANE
    pad = s_pad_total - S

    # ---- lane-dense (rows, 128) layout; pad tail (logits 0, targets ignore_index, qw 0) ----
    prd_f = prd.reshape(B, C, S)
    tar_f = tar_i.reshape(B, S)
    qw_f = jnp.broadcast_to(quad_weights.astype(jnp.float32), (nlat, nlon)).reshape(S)
    if pad:
        prd_f = jnp.pad(prd_f, ((0, 0), (0, 0), (0, pad)))
        tar_f = jnp.pad(tar_f, ((0, 0), (0, pad)), constant_values=ignore_index)
        qw_f = jnp.pad(qw_f, (0, pad))
    prd_f = prd_f.reshape(B, C, r_pad, _LANE)
    tar_f = tar_f.reshape(B, r_pad, _LANE)
    qw_f = qw_f.reshape(r_pad, _LANE)

    # quadrature weights: resident in VMEM (loaded once) when they comfortably fit
    qw_bytes = r_pad * _LANE * 4
    qw_resident = 2 * qw_bytes <= 12 * 1024 * 1024
    if qw_resident:
        qw_spec = pl.BlockSpec((r_pad, _LANE), lambda b, s: (0, 0))
    else:
        qw_spec = pl.BlockSpec((r_blk, _LANE), lambda b, s: (s, 0))

    kernel = functools.partial(_focal_loss_kernel, alpha=float(alpha), gamma=float(gamma),
                               ignore_index=int(ignore_index), r_blk=int(r_blk),
                               qw_resident=bool(qw_resident))

    # VMEM budget: 2 pipeline buffers per streamed input + resident quad weights + slack
    prd_tile = C * r_blk * _LANE * prd_isize
    tar_tile = r_blk * _LANE * tar_isize
    need = 2 * (prd_tile + tar_tile) + 2 * (qw_bytes if qw_resident else r_blk * _LANE * 4)
    vmem_limit = int(min(56 * 1024 * 1024, max(need + 2 * 1024 * 1024, 24 * 1024 * 1024)))

    cost = pl.CostEstimate(
        flops=int(B * s_pad_total * (6 * C + 12)),
        transcendentals=int(B * s_pad_total * (C + 2)),
        bytes_accessed=int(prd_f.size * prd_isize + tar_f.size * tar_isize
                           + qw_f.size * 4 + B * ns * 4),
    )

    out = pl.pallas_call(
        kernel,
        out_shape=jax.ShapeDtypeStruct((B, ns, 1, 1), jnp.float32),
        grid_spec=pltpu.PrefetchScalarGridSpec(
            num_scalar_prefetch=0,
            grid=(B, ns),
            in_specs=[
                pl.BlockSpec((None, C, r_blk, _LANE), lambda b, s: (b, 0, s, 0)),   # logits
                pl.BlockSpec((None, r_blk, _LANE), lambda b, s: (b, s, 0)),         # targets
                qw_spec,                                                            # quad weights
            ],
            out_specs=pl.BlockSpec((None, None, 1, 1), lambda b, s: (b, s, 0, 0)),  # partials
        ),
        compiler_params=pltpu.CompilerParams(
            dimension_semantics=("parallel", "parallel"),
            vmem_limit_bytes=vmem_limit),
        cost_estimate=cost,
    )(prd_f, tar_f, qw_f)

    # per-(batch, chunk) partials -> per-batch sums -> batch mean (tiny, plain JAX)
    return jnp.sum(out) / B


# ---------------------------------------------------------------------------
# Pure-JAX reference (mirrors the PyTorch forward) for a correctness check
# ---------------------------------------------------------------------------
def _reference_loss(prd, tar, q, *, alpha=0.25, gamma=2.0, ignore_index=-100):
    logits = jax.nn.log_softmax(prd, axis=1)
    logp = jax.nn.log_softmax(logits, axis=1)          # cross_entropy re-applies log_softmax (idempotent)
    C = prd.shape[1]
    onehot = jax.nn.one_hot(tar, C, axis=1, dtype=logp.dtype)     # negative (ignored) -> all zeros
    picked = jnp.sum(onehot * logp, axis=1)            # (B, nlat, nlon)
    ce = jnp.where(tar != ignore_index, -picked, 0.0)
    fl = alpha * (1.0 - jnp.exp(-ce)) ** gamma * ce
    fl = jnp.sum(fl * q, axis=(-2, -1))                # q (nlat,1) broadcasts over lon -> (B,)
    return jnp.mean(fl)


if __name__ == "__main__":
    B, C, nlat, nlon = 2, 4, 16, 32

    key = jax.random.PRNGKey(0)
    k1, k2, k3 = jax.random.split(key, 3)
    prd = jax.random.normal(k1, (B, C, nlat, nlon), dtype=jnp.float32)
    tar = jax.random.randint(k2, (B, nlat, nlon), 0, C, dtype=jnp.int32)
    # sprinkle some ignored pixels to exercise the ignore_index path
    ignore_mask = jax.random.uniform(k3, (B, nlat, nlon)) < 0.1
    tar = jnp.where(ignore_mask, jnp.int32(-100), tar)

    quad_weights = get_quadrature_weights(nlat=nlat, nlon=nlon, grid="equiangular",
                                          normalized=True)

    loss = focal_loss_s2(prd, tar, quad_weights, alpha=0.25, gamma=2.0, ignore_index=-100)
    loss = jax.block_until_ready(loss)

    ref = jax.block_until_ready(_reference_loss(prd, tar, quad_weights,
                                                alpha=0.25, gamma=2.0, ignore_index=-100))
    assert np.allclose(np.asarray(loss), np.asarray(ref), rtol=1e-5, atol=1e-6), (loss, ref)

    print("KERNEL_OK")
</pallas_src>

<mosaic_0001>
module attributes {stable_mosaic.version = 11 : i64} {
  func.func @_focal_loss_kernel(%arg0: i32, %arg1: i32, %arg2: memref<1x4x8x128xf32, #tpu.memory_space<vmem>>, %arg3: memref<1x8x128xi32, #tpu.memory_space<vmem>>, %arg4: memref<8x128xf32, #tpu.memory_space<vmem>>, %arg5: memref<1x1x1x1xf32, #tpu.memory_space<vmem>>) attributes {dimension_semantics = [#tpu.dimension_semantics<parallel>, #tpu.dimension_semantics<parallel>], iteration_bounds = array<i64: 2, 1>, scalar_prefetch = 0 : i64, scratch_operands = 0 : i64, tpu.core_type = #tpu.core_type<tc>, window_params = [{transform_indices = @transform_0, window_bounds = array<i64: 1, 4, 8, 128>}, {transform_indices = @transform_1, window_bounds = array<i64: 1, 8, 128>}, {pipeline_mode = #tpu.pipeline_mode<synchronous>, transform_indices = @transform_2, window_bounds = array<i64: 8, 128>}, {transform_indices = @transform_3, window_bounds = array<i64: 1, 1, 1, 1>}]} {
    %c0 = arith.constant 0 : index
    %c0_0 = arith.constant 0 : index
    %c0_1 = arith.constant 0 : index
    %c0_2 = arith.constant 0 : index
    %0 = vector.load %arg2[%c0, %c0_0, %c0_1, %c0_2] : memref<1x4x8x128xf32, #tpu.memory_space<vmem>>, vector<1x4x8x128xf32>
    %1 = vector.shape_cast %0 : vector<1x4x8x128xf32> to vector<4x8x128xf32>
    %c0_3 = arith.constant 0 : index
    %c0_4 = arith.constant 0 : index
    %c0_5 = arith.constant 0 : index
    %2 = vector.load %arg3[%c0_3, %c0_4, %c0_5] : memref<1x8x128xi32, #tpu.memory_space<vmem>>, vector<1x8x128xi32>
    %3 = vector.shape_cast %2 : vector<1x8x128xi32> to vector<8x128xi32>
    %cst = arith.constant dense<0xFF800000> : vector<8x128xf32>
    %4 = vector.multi_reduction <maximumf>, %1, %cst [0] : vector<4x8x128xf32> to vector<8x128xf32>
    %5 = vector.shape_cast %4 : vector<8x128xf32> to vector<1x8x128xf32>
    %6 = vector.broadcast %5 : vector<1x8x128xf32> to vector<4x8x128xf32>
    %7 = arith.subf %1, %6 : vector<4x8x128xf32>
    %8 = math.exp %7 : vector<4x8x128xf32>
    %cst_6 = arith.constant dense<0.000000e+00> : vector<8x128xf32>
    %9 = vector.multi_reduction <add>, %8, %cst_6 [0] : vector<4x8x128xf32> to vector<8x128xf32>
    %10 = math.log %9 : vector<8x128xf32>
    %11 = tpu.iota {dimensions = array<i32: 0>} : vector<4x8x128xi32>
    %12 = vector.shape_cast %3 : vector<8x128xi32> to vector<1x8x128xi32>
    %13 = vector.broadcast %12 : vector<1x8x128xi32> to vector<4x8x128xi32>
    %14 = arith.cmpi eq, %11, %13 : vector<4x8x128xi32>
    %cst_7 = arith.constant 0.000000e+00 : f32
    %15 = vector.broadcast %cst_7 : f32 to vector<4x8x128xf32>
    %16 = arith.select %14, %7, %15 : vector<4x8x128xi1>, vector<4x8x128xf32>
    %cst_8 = arith.constant dense<0.000000e+00> : vector<8x128xf32>
    %17 = vector.multi_reduction <add>, %16, %cst_8 [0] : vector<4x8x128xf32> to vector<8x128xf32>
    %c-100_i32 = arith.constant -100 : i32
    %18 = vector.broadcast %c-100_i32 : i32 to vector<8x128xi32>
    %19 = arith.cmpi ne, %3, %18 : vector<8x128xi32>
    %20 = arith.subf %10, %17 : vector<8x128xf32>
    %cst_9 = arith.constant 0.000000e+00 : f32
    %21 = vector.broadcast %cst_9 : f32 to vector<8x128xf32>
    %22 = arith.select %19, %20, %21 : vector<8x128xi1>, vector<8x128xf32>
    %cst_10 = arith.constant 0.000000e+00 : f32
    %23 = vector.broadcast %cst_10 : f32 to vector<8x128xf32>
    %24 = arith.subf %23, %22 : vector<8x128xf32>
    %25 = math.exp %24 : vector<8x128xf32>
    %cst_11 = arith.constant 1.000000e+00 : f32
    %26 = vector.broadcast %cst_11 : f32 to vector<8x128xf32>
    %27 = arith.subf %26, %25 : vector<8x128xf32>
    %28 = arith.mulf %27, %27 : vector<8x128xf32>
    %cst_12 = arith.constant 2.500000e-01 : f32
    %29 = vector.broadcast %cst_12 : f32 to vector<8x128xf32>
    %30 = arith.mulf %29, %28 : vector<8x128xf32>
    %31 = arith.mulf %30, %22 : vector<8x128xf32>
    %c8_i32 = arith.constant 8 : i32
    %32 = arith.muli %arg1, %c8_i32 : i32
    %33 = tpu.assume_multiple %32, 8 : i32
    %34 = arith.index_cast %33 : i32 to index
    %c0_13 = arith.constant 0 : index
    %35 = vector.load %arg4[%34, %c0_13] : memref<8x128xf32, #tpu.memory_space<vmem>>, vector<8x128xf32>
    %36 = arith.mulf %31, %35 : vector<8x128xf32>
    %37 = vector.shape_cast %36 : vector<8x128xf32> to vector<1x8x128xf32>
    %cst_14 = arith.constant dense<0.000000e+00> : vector<1xf32>
    %38 = vector.multi_reduction <add>, %37, %cst_14 [1, 2] : vector<1x8x128xf32> to vector<1xf32>
    %39 = vector.shape_cast %38 : vector<1xf32> to vector<1x1x1xf32>
    %40 = vector.extract %39[0, 0, 0] : f32 from vector<1x1x1xf32>
    %41 = vector.broadcast %40 : f32 to vector<1x1xf32>
    %c0_15 = arith.constant 0 : index
    %c0_16 = arith.constant 0 : index
    %c0_17 = arith.constant 0 : index
    %c0_18 = arith.constant 0 : index
    %42 = vector.load %arg5[%c0_15, %c0_16, %c0_17, %c0_18] : memref<1x1x1x1xf32, #tpu.memory_space<vmem>>, vector<1x1x1x1xf32>
    %43 = vector.shape_cast %42 : vector<1x1x1x1xf32> to vector<1x1xf32>
    %44 = vector.shape_cast %41 : vector<1x1xf32> to vector<1x1x1x1xf32>
    tpu.vector_store %arg5[%c0_15, %c0_16, %c0_17, %c0_18], %44 {strides = array<i32>} : memref<1x1x1x1xf32, #tpu.memory_space<vmem>>, vector<1x1x1x1xf32>,
    return
  }
  func.func @transform_0(%arg0: i32, %arg1: i32) -> (i32, i32, i32, i32) {
    %c0_i32 = arith.constant 0 : i32
    %c0_i32_0 = arith.constant 0 : i32
    %c0_i32_1 = arith.constant 0 : i32
    return %arg0, %c0_i32, %arg1, %c0_i32_0 : i32, i32, i32, i32
  }
  func.func @transform_1(%arg0: i32, %arg1: i32) -> (i32, i32, i32) {
    %c0_i32 = arith.constant 0 : i32
    %c0_i32_0 = arith.constant 0 : i32
    return %arg0, %arg1, %c0_i32 : i32, i32, i32
  }
  func.func @transform_2(%arg0: i32, %arg1: i32) -> (i32, i32) {
    %c0_i32 = arith.constant 0 : i32
    %c0_i32_0 = arith.constant 0 : i32
    %c0_i32_1 = arith.constant 0 : i32
    return %c0_i32, %c0_i32_0 : i32, i32
  }
  func.func @transform_3(%arg0: i32, %arg1: i32) -> (i32, i32, i32, i32) {
    %c0_i32 = arith.constant 0 : i32
    %c0_i32_0 = arith.constant 0 : i32
    %c0_i32_1 = arith.constant 0 : i32
    return %arg0, %arg1, %c0_i32, %c0_i32_0 : i32, i32, i32, i32
  }
}

</mosaic_0001>

<llo_original>
// kernel: tpu_custom_call.1
$region0: #{tpu_custom_call.1}
  #allocation0 [shape = 'u32[]', space=smem, size = 0x4, offset = 0x4, fixed_abs, tag = 'smem constant byte address 0x4 - core index']
  #allocation1 [shape = 'u32[144,128]{1,0:T(1,128)}', space=vmem, size = 0x12000, scoped, tag = 'internal scratch']
  %s0 = inlined_call_operand.hbm [shape: f32[2,4,8,128], index: 0, kind: input, shape index: {}]
  %s1 = inlined_call_operand.hbm [shape: s32[2,8,128], index: 1, kind: input, shape index: {}]
  %s2 = inlined_call_operand.hbm [shape: f32[8,128], index: 2, kind: input, shape index: {}]
  %s3 = inlined_call_operand.vmem [shape: f32[2,1,1,1], index: 3, kind: output, shape index: {}]
  %s4 = sld [smem:[#allocation0]]
  $region57: #{tpu_custom_call.1} parent=0
    _
  %s6 = ssub.s32 1, %s4
  %s7 = scalar_select 0, %s6, %s4
  $region1: #{tpu_custom_call.1} parent=0
    #allocation2 [shape = 'u8[32768]{0}', space=vmem, size = 0x8000, scoped, tag = 'input window, operand 0']
    #allocation3 [shape = 's32[2]{0}', space=sflag, size = 0x8, scoped, tag = 'scoped memory for tpu_custom_call.1']
    #allocation4 [shape = 'u8[8192]{0}', space=vmem, size = 0x2000, scoped, tag = 'input window, operand 1']
    #allocation5 [shape = 's32[2]{0}', space=sflag, size = 0x8, scoped, tag = 'scoped memory for tpu_custom_call.1']
    #allocation6 [shape = 'u8[4096]{0}', space=vmem, size = 0x1000, scoped, tag = 'input window, operand 2, single buffered']
    %8 = vsyncpa [#allocation3], 0
    %s9 = scalar_lea.sflag [#allocation3], 1
    %10 = vsyncpa %s9, 0
    %11 = vsyncpa [#allocation5], 0
    %s12 = scalar_lea.sflag [#allocation5], 1
    %13 = vsyncpa %s12, 0
    loop: start=0, step=1, limit=4
    $region2: #{tpu_custom_call.1} parent=1 // loop_pre_header
      _
    $region3: #{tpu_custom_call.1} parent=1 // loop_header
      %s15 = sphi 0, %s19
      %p16 = scmp.ge.s32.totalorder %s15, 4
      %s22 = sphi 0, %s34
      %s23 = sphi 0, %s30
      %s24 = sphi 0, %s22
      %s25 = sphi 0, %s23
      %s26 = sphi 0, %s24
      %s27 = sphi 0, %s25
      %s39 = sphi 0, %s41
      %s42 = sphi 0, %s39
      %s43 = sphi 0, %s42
      %s59 = sphi 0, %s43
      %s67 = sphi 0, %s69
      %s70 = sphi 0, %s67
      %s71 = sphi 0, %s70
      %s87 = sphi 0, %s71
      %s91 = sphi 0, %s91
      %s93 = sphi 0, %s91
      %s94 = sphi 0, %s93
      %s108 = sphi 0, %s94
      %s116 = sphi 0, %s118
      %s119 = sphi 0, %s116
      %s120 = sphi 0, %s119
      %s136 = sphi 0, %s120
    $region4: #{tpu_custom_call.1} parent=1 // loop_header_branch
      %18 = sbr.rel (%p16) target = $region8
    $region5: #{tpu_custom_call.1} parent=1 // loop_body
      %s20 = ssub.s32 %s15, 1
      %s21 = ssub.s32 %s15, 2
      %s28 = sadd.s32 1, %s23
      %p29 = scmp.ge.s32.totalorder %s28, 1
      %s30 = scalar_select %p29, 0, %s28
      %s31 = sadd.s32 1, %s22
      %s32 = scalar_select %p29, %s31, %s22
      %p33 = scmp.ge.s32.totalorder %s32, 2
      %s34 = scalar_select %p33, 0, %s32
      %s35 = ssub.s32 %s22, %s34
      %s36 = ssub.s32 %s23, %s30
      %s37 = sor.u32 %s35, %s36
      %p38 = scmp.eq.s32.totalorder %s37, 0
      %s40 = sadd.s32 %s39, 1
      %s41 = scalar_select %p38, %s39, %s40
      %p44 = pneg %p38
      %p45 = scmp.eq.s32.totalorder %s15, 1
      %p46 = por %p44, %p45
      %p47 = scmp.ne.s32.totalorder %s39, %s42
      %p48 = scmp.eq.s32.totalorder %s15, 0
      %p49 = por %p47, %p48
      %p50 = scmp.ne.s32.totalorder %s39, %s42
      %p51 = scmp.eq.s32.totalorder %s20, 1
      %p52 = por %p50, %p51
      %p53 = scmp.ne.s32.totalorder %s42, %s43
      %p54 = scmp.eq.s32.totalorder %s20, 0
      %p55 = por %p53, %p54
      %p56 = scmp.ne.s32.totalorder %s42, %s43
      %p57 = scmp.eq.s32.totalorder %s21, 1
      %p58 = por %p56, %p57
      %p60 = scmp.ne.s32.totalorder %s43, %s59
      %p61 = scmp.eq.s32.totalorder %s21, 0
      %p62 = por %p60, %p61
      %s63 = ssub.s32 %s22, %s34
      %s64 = ssub.s32 %s23, %s30
      %s65 = sor.u32 %s63, %s64
      %p66 = scmp.eq.s32.totalorder %s65, 0
      %s68 = sadd.s32 %s67, 1
      %s69 = scalar_select %p66, %s67, %s68
      %p72 = pneg %p66
      %p73 = scmp.eq.s32.totalorder %s15, 1
      %p74 = por %p72, %p73
      %p75 = scmp.ne.s32.totalorder %s67, %s70
      %p76 = scmp.eq.s32.totalorder %s15, 0
      %p77 = por %p75, %p76
      %p78 = scmp.ne.s32.totalorder %s67, %s70
      %p79 = scmp.eq.s32.totalorder %s20, 1
      %p80 = por %p78, %p79
      %p81 = scmp.ne.s32.totalorder %s70, %s71
      %p82 = scmp.eq.s32.totalorder %s20, 0
      %p83 = por %p81, %p82
      %p84 = scmp.ne.s32.totalorder %s70, %s71
      %p85 = scmp.eq.s32.totalorder %s21, 1
      %p86 = por %p84, %p85
      %p88 = scmp.ne.s32.totalorder %s71, %s87
      %p89 = scmp.eq.s32.totalorder %s21, 0
      %p90 = por %p88, %p89
      %s92 = sadd.s32 %s91, 1
      %p95 = scmp.eq.s32.totalorder %s15, 1
      %p96 = scmp.ne.s32.totalorder %s91, %s93
      %p97 = scmp.eq.s32.totalorder %s15, 0
      %p98 = por %p96, %p97
      %p99 = scmp.ne.s32.totalorder %s91, %s93
      %p100 = scmp.eq.s32.totalorder %s20, 1
      %p101 = por %p99, %p100
      %p102 = scmp.ne.s32.totalorder %s93, %s94
      %p103 = scmp.eq.s32.totalorder %s20, 0
      %p104 = por %p102, %p103
      %p105 = scmp.ne.s32.totalorder %s93, %s94
      %p106 = scmp.eq.s32.totalorder %s21, 1
      %p107 = por %p105, %p106
      %p109 = scmp.ne.s32.totalorder %s94, %s108
      %p110 = scmp.eq.s32.totalorder %s21, 0
      %p111 = por %p109, %p110
      %s112 = ssub.s32 %s22, %s34
      %s113 = ssub.s32 %s23, %s30
      %s114 = sor.u32 %s112, %s113
      %p115 = scmp.eq.s32.totalorder %s114, 0
      %s117 = sadd.s32 %s116, 1
      %s118 = scalar_select %p115, %s116, %s117
      %p121 = pneg %p115
      %p122 = scmp.eq.s32.totalorder %s15, 1
      %p123 = por %p121, %p122
      %p124 = scmp.ne.s32.totalorder %s116, %s119
      %p125 = scmp.eq.s32.totalorder %s15, 0
      %p126 = por %p124, %p125
      %p127 = scmp.ne.s32.totalorder %s116, %s119
      %p128 = scmp.eq.s32.totalorder %s20, 1
      %p129 = por %p127, %p128
      %p130 = scmp.ne.s32.totalorder %s119, %s120
      %p131 = scmp.eq.s32.totalorder %s20, 0
      %p132 = por %p130, %p131
      %p133 = scmp.ne.s32.totalorder %s119, %s120
      %p134 = scmp.eq.s32.totalorder %s21, 1
      %p135 = por %p133, %p134
      %p137 = scmp.ne.s32.totalorder %s120, %s136
      %p138 = scmp.eq.s32.totalorder %s21, 0
      %p139 = por %p137, %p138
      %p140 = scmp.le.s32.totalorder 1, %s15
      %p141 = scmp.lt.s32.totalorder %s15, 3
      %p142 = pnand %p140, %p141
      %p143 = pneg %p142
      // Predicated region
      $region9: #{tpu_custom_call.1} parent=5 // pred_check
        _
      $region10: #{tpu_custom_call.1} parent=5 // pred_check_branch
        %145 = sbr.rel (%p142) target = $region12
      $region11: #{tpu_custom_call.1} parent=5 // pred_region
        %s146 = ssub.s32 %s15, 1
        // Predicated region
        $region13: #{tpu_custom_call.1} parent=11 // pred_check
          %p147 = pneg %p104
        $region14: #{tpu_custom_call.1} parent=11 // pred_check_branch
          %149 = sbr.rel (%p147) target = $region16
        $region15: #{tpu_custom_call.1} parent=11 // pred_region
          %s151 = ssub.s32 128, 128
          %152 = vsyncadd [#allocation5], %s151
          %s154 = sshll.u32 [#allocation6], 4
          %s155 = int_to_ptr.vmem [resolvable:$true] %s154
          %157 = dma.hbm_to_vmem [thread:$0]  %s2, 128, %s155, [#allocation5]
        $region16: #{tpu_custom_call.1} parent=11 // pred_fallthru
          _
      $region12: #{tpu_custom_call.1} parent=5 // pred_fallthru
        _
      %p158 = scmp.lt.s32.totalorder %s15, 2
      // Predicated region
      $region17: #{tpu_custom_call.1} parent=5 // pred_check
        %p159 = pneg %p158
      $region18: #{tpu_custom_call.1} parent=5 // pred_check_branch
        %161 = sbr.rel (%p159) target = $region20
      $region19: #{tpu_custom_call.1} parent=5 // pred_region
        // Predicated region
        $region21: #{tpu_custom_call.1} parent=19 // pred_check
          %p162 = pneg %p49
        $region22: #{tpu_custom_call.1} parent=19 // pred_check_branch
          %164 = sbr.rel (%p162) target = $region24
        $region23: #{tpu_custom_call.1} parent=19 // pred_region
          %s165 = sand.u32 %s39, 1
          %s166 = scalar_lea.sflag [#allocation3], %s165
          %s167 = sand.u32 %s39, 1
          %s168 = smul.addr %s167, 32
          %s169 = scalar_lea.vmem [#allocation2], %s168
          %s171 = ssub.s32 512, 512
          %172 = vsyncadd %s166, %s171
          %s173 = smul.addr %s22, 4
          %s174 = sadd.s32 %s23, %s173
          %s175 = smul.addr %s174, 128
          %s176 = scalar_lea.hbm %s0, %s175
          %s177 = sshll.u32 %s169, 4
          %s178 = int_to_ptr.vmem [resolvable:$true] %s177
          %183 = dma.hbm_to_vmem [thread:$0]  %s176, 512, %s178, %s166, 128, 128, 8
        $region24: #{tpu_custom_call.1} parent=19 // pred_fallthru
          _
        // Predicated region
        $region25: #{tpu_custom_call.1} parent=19 // pred_check
          %p184 = pneg %p77
        $region26: #{tpu_custom_call.1} parent=19 // pred_check_branch
          %186 = sbr.rel (%p184) target = $region28
        $region27: #{tpu_custom_call.1} parent=19 // pred_region
          %s187 = sand.u32 %s15, 1
          %s188 = scalar_lea.sflag [#allocation5], %s187
          %s189 = sand.u32 %s67, 1
          %s190 = smul.addr %s189, 8
          %s191 = scalar_lea.vmem [#allocation4], %s190
          %s193 = ssub.s32 128, 128
          %194 = vsyncadd %s188, %s193
          %s195 = sadd.s32 %s23, %s22
          %s196 = smul.addr %s195, 128
          %s197 = scalar_lea.hbm %s1, %s196
          %s199 = sshll.u32 %s191, 4
          %s200 = int_to_ptr.vmem [resolvable:$true] %s199
          %202 = dma.hbm_to_vmem [thread:$0]  %s197, 128, %s200, %s188
        $region28: #{tpu_custom_call.1} parent=19 // pred_fallthru
          _
      $region20: #{tpu_custom_call.1} parent=5 // pred_fallthru
        _
      %p203 = scmp.le.s32.totalorder 1, %s15
      %p204 = scmp.lt.s32.totalorder %s15, 3
      %p205 = pnand %p203, %p204
      %p206 = pneg %p205
      // Predicated region
      $region29: #{tpu_custom_call.1} parent=5 // pred_check
        _
      $region30: #{tpu_custom_call.1} parent=5 // pred_check_branch
        %208 = sbr.rel (%p205) target = $region32
      $region31: #{tpu_custom_call.1} parent=5 // pred_region
        %s209 = ssub.s32 %s15, 1
        %s210 = sand.u32 %s42, 1
        %s211 = scalar_lea.sflag [#allocation3], %s210
        %s212 = sand.u32 %s42, 1
        %s213 = smul.addr %s212, 32
        %s214 = scalar_lea.vmem [#allocation2], %s213
        // Predicated region
        $region33: #{tpu_custom_call.1} parent=31 // pred_check
          %p215 = pneg %p55
        $region34: #{tpu_custom_call.1} parent=31 // pred_check_branch
          %217 = sbr.rel (%p215) target = $region36
        $region35: #{tpu_custom_call.1} parent=31 // pred_region
          %218 = dma.done %s211, 512
        $region36: #{tpu_custom_call.1} parent=31 // pred_fallthru
          _
        %s219 = sand.u32 %s20, 1
        %s220 = scalar_lea.sflag [#allocation5], %s219
        %s221 = sand.u32 %s70, 1
        %s222 = smul.addr %s221, 8
        %s223 = scalar_lea.vmem [#allocation4], %s222
        // Predicated region
        $region37: #{tpu_custom_call.1} parent=31 // pred_check
          %p224 = pneg %p83
        $region38: #{tpu_custom_call.1} parent=31 // pred_check_branch
          %226 = sbr.rel (%p224) target = $region40
        $region39: #{tpu_custom_call.1} parent=31 // pred_region
          %227 = dma.done %s220, 128
        $region40: #{tpu_custom_call.1} parent=31 // pred_fallthru
          _
        // Predicated region
        $region41: #{tpu_custom_call.1} parent=31 // pred_check
          %p228 = pneg %p104
        $region42: #{tpu_custom_call.1} parent=31 // pred_check_branch
          %230 = sbr.rel (%p228) target = $region44
        $region43: #{tpu_custom_call.1} parent=31 // pred_region
          %231 = dma.done [#allocation5], 128
        $region44: #{tpu_custom_call.1} parent=31 // pred_fallthru
          _
        %s232 = sand.u32 %s42, 1
        %s233 = scalar_lea.sflag [#allocation3], %s232
        %s234 = sand.u32 %s42, 1
        %s235 = smul.addr %s234, 32
        %s236 = scalar_lea.vmem [#allocation2], %s235
        %p237 = pneg %p55
        %p238 = pneg %p52
        %s239 = sand.u32 %s20, 1
        %s240 = scalar_lea.sflag [#allocation5], %s239
        %s241 = sand.u32 %s70, 1
        %s242 = smul.addr %s241, 8
        %s243 = scalar_lea.vmem [#allocation4], %s242
        %p244 = pneg %p83
        %p245 = pneg %p80
        %p246 = pneg %p104
        %p247 = pneg %p101
        %p248 = pneg %p132
        %p249 = pneg %p129
        %p250 = scmp.lt.s32.totalorder %s24, 1
        %s251 = scalar_select %p250, %s24, 1
        %p252 = scmp.lt.s32.totalorder %s25, 0
        %s253 = scalar_select %p252, %s25, 0
        %s254 = sadd.s32 %s253, %s251
        %s255 = scalar_lea.vmem %s3, %s254
        %p256 = scmp.lt.s32.totalorder %s24, 1
        %s257 = scalar_select %p256, %s24, 1
        %p258 = scmp.lt.s32.totalorder %s25, 0
        %s259 = scalar_select %p258, %s25, 0
        %s260 = sadd.s32 %s259, %s257
        %s261 = scalar_lea.vmem %s3, %s260
        %v262 = vld [vmem:[%s214] sm:$0xff]
        %v263 = vld [vmem:[%s214 + $0x8] sm:$0xff]
        %v264 = vld [vmem:[%s214 + $0x10] sm:$0xff]
        %v265 = vld [vmem:[%s214 + $0x18] sm:$0xff]
        %v266 = vld [vmem:[%s223] sm:$0xff]
        %v267 = vmax.f32 %v262, %v263
        %v268 = vmax.f32 %v264, %v265
        %v269 = vmax.f32 %v267, %v268
        %v270 = vsub.f32 %v262, %v269
        %v271 = vsub.f32 %v263, %v269
        %v272 = vsub.f32 %v264, %v269
        %v273 = vsub.f32 %v265, %v269
        %v274 = vmul.f32 %v270, 1.442695
        %v275 = vpow.pop %v274
        %v276 = vmul.f32 %v271, 1.442695
        %v277 = vpow.pop %v276
        %v278 = vmul.f32 %v272, 1.442695
        %v279 = vpow.pop %v278
        %v280 = vmul.f32 %v273, 1.442695
        %v281 = vpow.pop %v280
        %v282 = vadd.f32 %v275, %v277
        %v283 = vadd.f32 %v282, %v279
        %v284 = vadd.f32 %v283, %v281
        %v285 = vlog2.pop %v284
        %v286 = vmul.f32 %v285, 0.6931472
        %vm287 = vcmp.eq.s32.totalorder %v266, 0
        %vm288 = vcmp.eq.s32.totalorder %v266, 1
        %vm289 = vcmp.eq.s32.totalorder %v266, 2
        %vm290 = vcmp.eq.s32.totalorder %v266, 3
        %v291 = vsel %vm287, %v270, 0.0
        %v292 = vsel %vm288, %v271, 0.0
        %v293 = vsel %vm289, %v272, 0.0
        %v294 = vsel %vm290, %v273, 0.0
        %v295 = vadd.f32 %v291, %v292
        %v296 = vadd.f32 %v295, %v293
        %v297 = vadd.f32 %v296, %v294
        %vm298 = vcmp.ne.s32.totalorder %v266, 4294967196
        %v299 = vsub.f32 %v286, %v297
        %v300 = vsel %vm298, %v299, 0.0
        %v301 = vsub.f32 0.0, %v300
        %v302 = vmul.f32 %v301, 1.442695
        %v303 = vpow.pop %v302
        %v304 = vsub.f32 1.0, %v303
        %v305 = vmul.f32 %v304, %v304
        %v306 = vmul.f32 %v305, 0.25
        %v307 = vmul.f32 %v306, %v300
        %s308 = smul.u32 %s25, 8
        %s309 = scalar_lea.vmem [#allocation6], %s308
        %v310 = vld [vmem:[%s309] sm:$0xff]
        %v311 = vmul.f32 %v307, %v310
        %312 = vadd.xlane.f32.xlu0 %v311
        %v313 = vpop.xlane.xlu0 %312
        %v314 = vrot.slane %v313, 4
        %v315 = vadd.f32 %v313, %v314
        %v316 = vrot.slane %v315, 2
        %v317 = vadd.f32 %v315, %v316
        %v318 = vrot.slane %v317, 1
        %v319 = vadd.f32 %v317, %v318
        %s320 = vtos %v319
        %v321 = vstv %s320
        %vm322 = vcmask 0
        %323 = vst.msk [vmem:[%s261] sm:$0x1] %vm322, %v321
        %p324 = scmp.lt.s32.totalorder %s24, 1
        %s325 = scalar_select %p324, %s24, 1
        %p326 = scmp.lt.s32.totalorder %s25, 0
        %s327 = scalar_select %p326, %s25, 0
        %s328 = sadd.s32 %s327, %s325
        %s329 = scalar_lea.vmem %s3, %s328
        // Predicated region
        $region45: #{tpu_custom_call.1} parent=31 // pred_check
          %p330 = pneg %p129
        $region46: #{tpu_custom_call.1} parent=31 // pred_check_branch
          %332 = sbr.rel (%p330) target = $region48
        $region47: #{tpu_custom_call.1} parent=31 // pred_region
          _
        $region48: #{tpu_custom_call.1} parent=31 // pred_fallthru
          _
      $region32: #{tpu_custom_call.1} parent=5 // pred_fallthru
        _
      %p333 = scmp.le.s32.totalorder 2, %s15
      // Predicated region
      $region49: #{tpu_custom_call.1} parent=5 // pred_check
        %p334 = pneg %p333
      $region50: #{tpu_custom_call.1} parent=5 // pred_check_branch
        %336 = sbr.rel (%p334) target = $region52
      $region51: #{tpu_custom_call.1} parent=5 // pred_region
        %s337 = ssub.s32 %s15, 2
        // Predicated region
        $region53: #{tpu_custom_call.1} parent=51 // pred_check
          %p338 = pneg %p135
        $region54: #{tpu_custom_call.1} parent=51 // pred_check_branch
          %340 = sbr.rel (%p338) target = $region56
        $region55: #{tpu_custom_call.1} parent=51 // pred_region
          %p341 = scmp.lt.s32.totalorder %s26, 1
          %s342 = scalar_select %p341, %s26, 1
          %p343 = scmp.lt.s32.totalorder %s27, 0
          %s344 = scalar_select %p343, %s27, 0
          %s345 = sadd.s32 %s344, %s342
          %s346 = scalar_lea.vmem %s3, %s345
        $region56: #{tpu_custom_call.1} parent=51 // pred_fallthru
          _
      $region52: #{tpu_custom_call.1} parent=5 // pred_fallthru
        _
    $region6: #{tpu_custom_call.1} parent=1 // loop_footer
      %s19 = sadd.s32 1, %s15
    $region7: #{tpu_custom_call.1} parent=1 // loop_footer_branch
      %14 = sbr.rel target = $region3
    $region8: #{tpu_custom_call.1} parent=1 // loop_exit
      _
    %347 = vsyncpa [#allocation3], 1
    %s348 = scalar_lea.sflag [#allocation3], 1
    %349 = vsyncpa %s348, 1
    %350 = vsyncpa [#allocation5], 1
    %s351 = scalar_lea.sflag [#allocation5], 1
    %352 = vsyncpa %s351, 1

</llo_original>
